<compile_context>
chip_gen: v6e
topology: v6e:2x2x1
jax: 0.10.0
libtpu: 0.0.40
codegen_flags: <defaults>
</compile_context>

<pallas_src>
import math
import functools

import jax
import jax.numpy as jnp
from jax.experimental import pallas as pl
from jax.experimental.pallas import tpu as pltpu


def make_positional_encoding(max_len: int, d_model: int, dtype=jnp.float32):
    """Same buffer as the torch module's __init__ (shape (max_len, d_model))."""
    positions = jnp.arange(0, max_len, dtype=jnp.float32)[:, None]               # (max_len, 1)
    division_term = jnp.exp(
        jnp.arange(0, d_model, 2, dtype=jnp.float32) * (-math.log(10000.0) / d_model)
    )                                                                             # (d_model/2,)
    pe = jnp.zeros((max_len, d_model), dtype=jnp.float32)
    pe = pe.at[:, 0::2].set(jnp.sin(positions * division_term))
    pe = pe.at[:, 1::2].set(jnp.cos(positions * division_term))
    return pe.astype(dtype)


def _pe_add_kernel(x_ref, pe_ref, o_ref):
    # x_ref / o_ref: (TS, D) for one (seq-tile, batch) grid point.
    # pe_ref:        (TS, D), resident in VMEM across the inner batch axis.
    o_ref[...] = x_ref[...] + pe_ref[...].astype(x_ref.dtype)


def _pe_add_dropout_kernel(x_ref, pe_ref, bits_ref, o_ref, *, threshold, scale):
    # Inverted dropout: drop iff bits < threshold (threshold = round(p * 2^32)),
    # keep -> multiply by 1/(1-p).  Pure integer compare + one select + one mul.
    y = x_ref[...] + pe_ref[...].astype(x_ref.dtype)
    keep = bits_ref[...] >= jnp.uint32(threshold)
    o_ref[...] = jnp.where(keep, y * jnp.asarray(scale, y.dtype), jnp.zeros_like(y))


def _pick_seq_tile(S: int, D: int, itemsize: int, target_bytes: int = 1 << 20) -> int:
    """Largest seq tile dividing S with tile size <= ~1 MiB (keeps double
    buffering comfortably inside scoped VMEM on v5e/v6e/v7x)."""
    if S * D * itemsize <= target_bytes:
        return S
    for ts in (1024, 512, 256, 128, 64, 32, 16, 8):
        if S % ts == 0 and ts * D * itemsize <= target_bytes:
            return ts
    return S  # fallback for odd shapes: single full-seq tile


def positional_encoding_forward(x, pe_full, *, p=0.1, training=False, rng_key=None):
    """dropout(x + pe_full[:S])  with x: (B, S, D), pe_full: (max_len, D)."""
    B, S, D = x.shape
    assert pe_full.shape[0] >= S and pe_full.shape[1] == D

    ts = _pick_seq_tile(S, D, jnp.dtype(x.dtype).itemsize)
    n_s = S // ts
    grid = (n_s, B)  # seq-tiles OUTER, batch INNER -> pe tile stays resident

    x_spec = pl.BlockSpec((None, ts, D), lambda s, b: (b, s, 0))   # squeezed batch -> (TS, D)
    pe_spec = pl.BlockSpec((ts, D), lambda s, b: (s, 0))           # depends only on s
    out_spec = pl.BlockSpec((None, ts, D), lambda s, b: (b, s, 0))
    out_shape = jax.ShapeDtypeStruct((B, S, D), x.dtype)
    cparams = pltpu.CompilerParams(dimension_semantics=("parallel", "parallel"))

    apply_dropout = bool(training) and float(p) > 0.0
    if not apply_dropout:
        # Eval-mode forward: dropout is identity, exact elementwise add.
        return pl.pallas_call(
            _pe_add_kernel,
            out_shape=out_shape,
            grid=grid,
            in_specs=[x_spec, pe_spec],
            out_specs=out_spec,
            compiler_params=cparams,
        )(x, pe_full)

    # Training path: uniform uint32 bits from the host-side JAX PRNG, compared
    # against an integer threshold in-kernel (no float conversion).
    # NOTE: mask is not bit-identical to torch's RNG stream.
    if rng_key is None:
        rng_key = jax.random.PRNGKey(0)
    bits = jax.random.bits(rng_key, (B, S, D), dtype=jnp.uint32)
    threshold = min(int(round(float(p) * (2.0 ** 32))), 2 ** 32 - 1)
    scale = 1.0 / (1.0 - float(p))

    kernel = functools.partial(_pe_add_dropout_kernel, threshold=threshold, scale=scale)
    bits_spec = pl.BlockSpec((None, ts, D), lambda s, b: (b, s, 0))

    return pl.pallas_call(
        kernel,
        out_shape=out_shape,
        grid=grid,
        in_specs=[x_spec, pe_spec, bits_spec],
        out_specs=out_spec,
        compiler_params=cparams,
    )(x, pe_full, bits)


if __name__ == "__main__":
    # Small shapes consistent with the module's forward: (batch, seq, d_model).
    # d_model=128 keeps the lane axis dense (multiple of 128), seq=16 aligns sublanes.
    B, S, D = 2, 16, 128
    max_len = 64
    dropout_p = 0.1

    key = jax.random.PRNGKey(0)
    x = jax.random.normal(key, (B, S, D), dtype=jnp.float32)
    pe_full = make_positional_encoding(max_len, D, dtype=jnp.float32)

    # Eval-mode forward (dropout is identity) — matches module.eval() exactly.
    out = positional_encoding_forward(x, pe_full, p=dropout_p, training=False)
    out = jax.block_until_ready(out)
    ref = x + pe_full[None, :S, :]
    assert out.shape == (B, S, D)
    assert jnp.allclose(out, ref, atol=1e-6, rtol=1e-6), "eval-mode mismatch vs reference"

    # Training-mode forward (inverted dropout): surviving elements equal
    # (x + pe)/(1-p), dropped elements are exactly 0.
    out_train = positional_encoding_forward(
        x, pe_full, p=dropout_p, training=True, rng_key=jax.random.PRNGKey(123)
    )
    out_train = jax.block_until_ready(out_train)
    assert out_train.shape == (B, S, D)
    scaled_ref = ref / (1.0 - dropout_p)
    ok = jnp.isclose(out_train, scaled_ref, atol=1e-5) | (out_train == 0.0)
    assert bool(jnp.all(ok)), "training-mode dropout values inconsistent"

    print("KERNEL_OK")
</pallas_src>

<mosaic_0001>
module attributes {stable_mosaic.version = 11 : i64} {
  func.func @_pe_add_kernel(%arg0: i32, %arg1: i32, %arg2: memref<1x16x128xf32, #tpu.memory_space<vmem>>, %arg3: memref<16x128xf32, #tpu.memory_space<vmem>>, %arg4: memref<1x16x128xf32, #tpu.memory_space<vmem>>) attributes {dimension_semantics = [#tpu.dimension_semantics<parallel>, #tpu.dimension_semantics<parallel>], iteration_bounds = array<i64: 1, 2>, scalar_prefetch = 0 : i64, scratch_operands = 0 : i64, tpu.core_type = #tpu.core_type<tc>, window_params = [{transform_indices = @transform_0, window_bounds = array<i64: 1, 16, 128>}, {transform_indices = @transform_1, window_bounds = array<i64: 16, 128>}, {transform_indices = @transform_2, window_bounds = array<i64: 1, 16, 128>}]} {
    %c0 = arith.constant 0 : index
    %c0_0 = arith.constant 0 : index
    %c0_1 = arith.constant 0 : index
    %0 = vector.load %arg2[%c0, %c0_0, %c0_1] : memref<1x16x128xf32, #tpu.memory_space<vmem>>, vector<1x16x128xf32>
    %1 = vector.shape_cast %0 : vector<1x16x128xf32> to vector<16x128xf32>
    %c0_2 = arith.constant 0 : index
    %c0_3 = arith.constant 0 : index
    %2 = vector.load %arg3[%c0_2, %c0_3] : memref<16x128xf32, #tpu.memory_space<vmem>>, vector<16x128xf32>
    %3 = arith.addf %1, %2 : vector<16x128xf32>
    %c0_4 = arith.constant 0 : index
    %c0_5 = arith.constant 0 : index
    %c0_6 = arith.constant 0 : index
    %4 = vector.load %arg4[%c0_4, %c0_5, %c0_6] : memref<1x16x128xf32, #tpu.memory_space<vmem>>, vector<1x16x128xf32>
    %5 = vector.shape_cast %4 : vector<1x16x128xf32> to vector<16x128xf32>
    %6 = vector.shape_cast %3 : vector<16x128xf32> to vector<1x16x128xf32>
    tpu.vector_store %arg4[%c0_4, %c0_5, %c0_6], %6 {strides = array<i32>} : memref<1x16x128xf32, #tpu.memory_space<vmem>>, vector<1x16x128xf32>,
    return
  }
  func.func @transform_0(%arg0: i32, %arg1: i32) -> (i32, i32, i32) {
    %c0_i32 = arith.constant 0 : i32
    %c0_i32_0 = arith.constant 0 : i32
    return %arg1, %arg0, %c0_i32 : i32, i32, i32
  }
  func.func @transform_1(%arg0: i32, %arg1: i32) -> (i32, i32) {
    %c0_i32 = arith.constant 0 : i32
    %c0_i32_0 = arith.constant 0 : i32
    return %arg0, %c0_i32 : i32, i32
  }
  func.func @transform_2(%arg0: i32, %arg1: i32) -> (i32, i32, i32) {
    %c0_i32 = arith.constant 0 : i32
    %c0_i32_0 = arith.constant 0 : i32
    return %arg1, %arg0, %c0_i32 : i32, i32, i32
  }
}

</mosaic_0001>

<llo_original>
// kernel: tpu_custom_call.1
$region0: #{tpu_custom_call.1}
  #allocation0 [shape = 'u32[]', space=smem, size = 0x4, offset = 0x4, fixed_abs, tag = 'smem constant byte address 0x4 - core index']
  #allocation1 [shape = 'u32[144,128]{1,0:T(1,128)}', space=vmem, size = 0x12000, scoped, tag = 'internal scratch']
  %s0 = inlined_call_operand.hbm [shape: f32[2,16,128], index: 0, kind: input, shape index: {}]
  %s1 = inlined_call_operand.hbm [shape: f32[64,128], index: 1, kind: input, shape index: {}]
  %s2 = inlined_call_operand.hbm [shape: f32[2,16,128], index: 2, kind: output, shape index: {}]
  %s3 = sld [smem:[#allocation0]]
  $region49: #{tpu_custom_call.1} parent=0
    _
  %s5 = ssub.s32 1, %s3
  %s6 = scalar_select 0, %s5, %s3
  $region1: #{tpu_custom_call.1} parent=0
    #allocation2 [shape = 'u8[16384]{0}', space=vmem, size = 0x4000, scoped, tag = 'input window, operand 0']
    #allocation3 [shape = 's32[2]{0}', space=sflag, size = 0x8, scoped, tag = 'scoped memory for tpu_custom_call.1']
    #allocation4 [shape = 's32[2]{0}', space=sflag, size = 0x8, scoped, tag = 'scoped memory for tpu_custom_call.1']
    #allocation5 [shape = 'u8[8192]{0}', space=vmem, size = 0x2000, scoped, tag = 'input window, operand 1, single buffered']
    #allocation6 [shape = 's32[1]{0}', space=sflag, size = 0x4, scoped, tag = 'scoped memory for tpu_custom_call.1']
    #allocation7 [shape = 'u8[16384]{0}', space=vmem, size = 0x4000, scoped, tag = 'output window, operand 0']
    %7 = vsyncpa [#allocation3], 0
    %s8 = scalar_lea.sflag [#allocation3], 1
    %9 = vsyncpa %s8, 0
    %10 = vsyncpa [#allocation6], 0
    %11 = vsyncpa [#allocation4], 0
    %s12 = scalar_lea.sflag [#allocation4], 1
    %13 = vsyncpa %s12, 0
    loop: start=0, step=1, limit=4
    $region2: #{tpu_custom_call.1} parent=1 // loop_pre_header
      _
    $region3: #{tpu_custom_call.1} parent=1 // loop_header
      %s15 = sphi 0, %s19
      %p16 = scmp.ge.s32.totalorder %s15, 4
      %s22 = sphi 0, %s34
      %s23 = sphi 0, %s30
      %s24 = sphi 0, %s22
      %s25 = sphi 0, %s23
      %s26 = sphi 0, %s24
      %s27 = sphi 0, %s25
      %s39 = sphi 0, %s41
      %s42 = sphi 0, %s39
      %s43 = sphi 0, %s42
      %s59 = sphi 0, %s43
      %s65 = sphi 0, %s67
      %s68 = sphi 0, %s65
      %s69 = sphi 0, %s68
      %s85 = sphi 0, %s69
      %s93 = sphi 0, %s95
      %s96 = sphi 0, %s93
      %s97 = sphi 0, %s96
      %s113 = sphi 0, %s97
    $region4: #{tpu_custom_call.1} parent=1 // loop_header_branch
      %18 = sbr.rel (%p16) target = $region8
    $region5: #{tpu_custom_call.1} parent=1 // loop_body
      %s20 = ssub.s32 %s15, 1
      %s21 = ssub.s32 %s15, 2
      %s28 = sadd.s32 1, %s23
      %p29 = scmp.ge.s32.totalorder %s28, 2
      %s30 = scalar_select %p29, 0, %s28
      %s31 = sadd.s32 1, %s22
      %s32 = scalar_select %p29, %s31, %s22
      %p33 = scmp.ge.s32.totalorder %s32, 1
      %s34 = scalar_select %p33, 0, %s32
      %s35 = ssub.s32 %s23, %s30
      %s36 = ssub.s32 %s22, %s34
      %s37 = sor.u32 %s35, %s36
      %p38 = scmp.eq.s32.totalorder %s37, 0
      %s40 = sadd.s32 %s39, 1
      %s41 = scalar_select %p38, %s39, %s40
      %p44 = pneg %p38
      %p45 = scmp.eq.s32.totalorder %s15, 1
      %p46 = por %p44, %p45
      %p47 = scmp.ne.s32.totalorder %s39, %s42
      %p48 = scmp.eq.s32.totalorder %s15, 0
      %p49 = por %p47, %p48
      %p50 = scmp.ne.s32.totalorder %s39, %s42
      %p51 = scmp.eq.s32.totalorder %s20, 1
      %p52 = por %p50, %p51
      %p53 = scmp.ne.s32.totalorder %s42, %s43
      %p54 = scmp.eq.s32.totalorder %s20, 0
      %p55 = por %p53, %p54
      %p56 = scmp.ne.s32.totalorder %s42, %s43
      %p57 = scmp.eq.s32.totalorder %s21, 1
      %p58 = por %p56, %p57
      %p60 = scmp.ne.s32.totalorder %s43, %s59
      %p61 = scmp.eq.s32.totalorder %s21, 0
      %p62 = por %p60, %p61
      %s63 = ssub.s32 %s22, %s34
      %p64 = scmp.eq.s32.totalorder %s63, 0
      %s66 = sadd.s32 %s65, 1
      %s67 = scalar_select %p64, %s65, %s66
      %p70 = pneg %p64
      %p71 = scmp.eq.s32.totalorder %s15, 1
      %p72 = por %p70, %p71
      %p73 = scmp.ne.s32.totalorder %s65, %s68
      %p74 = scmp.eq.s32.totalorder %s15, 0
      %p75 = por %p73, %p74
      %p76 = scmp.ne.s32.totalorder %s65, %s68
      %p77 = scmp.eq.s32.totalorder %s20, 1
      %p78 = por %p76, %p77
      %p79 = scmp.ne.s32.totalorder %s68, %s69
      %p80 = scmp.eq.s32.totalorder %s20, 0
      %p81 = por %p79, %p80
      %p82 = scmp.ne.s32.totalorder %s68, %s69
      %p83 = scmp.eq.s32.totalorder %s21, 1
      %p84 = por %p82, %p83
      %p86 = scmp.ne.s32.totalorder %s69, %s85
      %p87 = scmp.eq.s32.totalorder %s21, 0
      %p88 = por %p86, %p87
      %s89 = ssub.s32 %s23, %s30
      %s90 = ssub.s32 %s22, %s34
      %s91 = sor.u32 %s89, %s90
      %p92 = scmp.eq.s32.totalorder %s91, 0
      %s94 = sadd.s32 %s93, 1
      %s95 = scalar_select %p92, %s93, %s94
      %p98 = pneg %p92
      %p99 = scmp.eq.s32.totalorder %s15, 1
      %p100 = por %p98, %p99
      %p101 = scmp.ne.s32.totalorder %s93, %s96
      %p102 = scmp.eq.s32.totalorder %s15, 0
      %p103 = por %p101, %p102
      %p104 = scmp.ne.s32.totalorder %s93, %s96
      %p105 = scmp.eq.s32.totalorder %s20, 1
      %p106 = por %p104, %p105
      %p107 = scmp.ne.s32.totalorder %s96, %s97
      %p108 = scmp.eq.s32.totalorder %s20, 0
      %p109 = por %p107, %p108
      %p110 = scmp.ne.s32.totalorder %s96, %s97
      %p111 = scmp.eq.s32.totalorder %s21, 1
      %p112 = por %p110, %p111
      %p114 = scmp.ne.s32.totalorder %s97, %s113
      %p115 = scmp.eq.s32.totalorder %s21, 0
      %p116 = por %p114, %p115
      %p117 = scmp.le.s32.totalorder 1, %s15
      %p118 = scmp.lt.s32.totalorder %s15, 3
      %p119 = pnand %p117, %p118
      %p120 = pneg %p119
      // Predicated region
      $region9: #{tpu_custom_call.1} parent=5 // pred_check
        _
      $region10: #{tpu_custom_call.1} parent=5 // pred_check_branch
        %122 = sbr.rel (%p119) target = $region12
      $region11: #{tpu_custom_call.1} parent=5 // pred_region
        %s123 = ssub.s32 %s15, 1
        // Predicated region
        $region13: #{tpu_custom_call.1} parent=11 // pred_check
          %p124 = pneg %p81
        $region14: #{tpu_custom_call.1} parent=11 // pred_check_branch
          %126 = sbr.rel (%p124) target = $region16
        $region15: #{tpu_custom_call.1} parent=11 // pred_region
          %s127 = smul.u32 2, %s24
          %s129 = ssub.s32 256, 256
          %130 = vsyncadd [#allocation6], %s129
          %s131 = smul.addr %s127, 128
          %s132 = scalar_lea.hbm %s1, %s131
          %s133 = sshll.u32 [#allocation5], 4
          %s134 = int_to_ptr.vmem [resolvable:$true] %s133
          %139 = dma.hbm_to_vmem [thread:$0]  %s132, 256, %s134, [#allocation6], 128, 128, 8
        $region16: #{tpu_custom_call.1} parent=11 // pred_fallthru
          _
      $region12: #{tpu_custom_call.1} parent=5 // pred_fallthru
        _
      %p140 = scmp.lt.s32.totalorder %s15, 2
      // Predicated region
      $region17: #{tpu_custom_call.1} parent=5 // pred_check
        %p141 = pneg %p140
      $region18: #{tpu_custom_call.1} parent=5 // pred_check_branch
        %143 = sbr.rel (%p141) target = $region20
      $region19: #{tpu_custom_call.1} parent=5 // pred_region
        // Predicated region
        $region21: #{tpu_custom_call.1} parent=19 // pred_check
          %p144 = pneg %p49
        $region22: #{tpu_custom_call.1} parent=19 // pred_check_branch
          %146 = sbr.rel (%p144) target = $region24
        $region23: #{tpu_custom_call.1} parent=19 // pred_region
          %s147 = sand.u32 %s39, 1
          %s148 = scalar_lea.sflag [#allocation3], %s147
          %s149 = sand.u32 %s39, 1
          %s150 = smul.addr %s149, 16
          %s151 = scalar_lea.vmem [#allocation2], %s150
          %s152 = smul.u32 2, %s22
          %s154 = ssub.s32 256, 256
          %155 = vsyncadd %s148, %s154
          %s156 = smul.addr %s23, 2
          %s157 = sadd.s32 %s152, %s156
          %s158 = smul.addr %s157, 128
          %s159 = scalar_lea.hbm %s0, %s158
          %s160 = sshll.u32 %s151, 4
          %s161 = int_to_ptr.vmem [resolvable:$true] %s160
          %166 = dma.hbm_to_vmem [thread:$0]  %s159, 256, %s161, %s148, 128, 128, 8
        $region24: #{tpu_custom_call.1} parent=19 // pred_fallthru
          _
      $region20: #{tpu_custom_call.1} parent=5 // pred_fallthru
        _
      %p167 = scmp.le.s32.totalorder 1, %s15
      %p168 = scmp.lt.s32.totalorder %s15, 3
      %p169 = pnand %p167, %p168
      %p170 = pneg %p169
      // Predicated region
      $region25: #{tpu_custom_call.1} parent=5 // pred_check
        _
      $region26: #{tpu_custom_call.1} parent=5 // pred_check_branch
        %172 = sbr.rel (%p169) target = $region28
      $region27: #{tpu_custom_call.1} parent=5 // pred_region
        %s173 = ssub.s32 %s15, 1
        %s174 = sand.u32 %s42, 1
        %s175 = scalar_lea.sflag [#allocation3], %s174
        %s176 = sand.u32 %s42, 1
        %s177 = smul.addr %s176, 16
        %s178 = scalar_lea.vmem [#allocation2], %s177
        // Predicated region
        $region29: #{tpu_custom_call.1} parent=27 // pred_check
          %p179 = pneg %p55
        $region30: #{tpu_custom_call.1} parent=27 // pred_check_branch
          %181 = sbr.rel (%p179) target = $region32
        $region31: #{tpu_custom_call.1} parent=27 // pred_region
          %182 = dma.done %s175, 256
        $region32: #{tpu_custom_call.1} parent=27 // pred_fallthru
          _
        // Predicated region
        $region33: #{tpu_custom_call.1} parent=27 // pred_check
          %p183 = pneg %p81
        $region34: #{tpu_custom_call.1} parent=27 // pred_check_branch
          %185 = sbr.rel (%p183) target = $region36
        $region35: #{tpu_custom_call.1} parent=27 // pred_region
          %186 = dma.done [#allocation6], 256
        $region36: #{tpu_custom_call.1} parent=27 // pred_fallthru
          _
        %s187 = sand.u32 %s42, 1
        %s188 = scalar_lea.sflag [#allocation3], %s187
        %s189 = sand.u32 %s42, 1
        %s190 = smul.addr %s189, 16
        %s191 = scalar_lea.vmem [#allocation2], %s190
        %p192 = pneg %p55
        %p193 = pneg %p52
        %p194 = pneg %p81
        %p195 = pneg %p78
        %p196 = pneg %p109
        %p197 = pneg %p106
        %s198 = sand.u32 %s96, 1
        %s199 = scalar_lea.sflag [#allocation4], %s198
        %s200 = sand.u32 %s96, 1
        %s201 = smul.addr %s200, 16
        %s202 = scalar_lea.vmem [#allocation7], %s201
        %s203 = smul.u32 2, %s24
        %s204 = smul.u32 2, %s24
        %s205 = smul.u32 2, %s24
        %v206 = vld [vmem:[%s178] sm:$0xff]
        %v207 = vld [vmem:[%s178 + $0x8] sm:$0xff]
        %v208 = vld [vmem:[#allocation5] sm:$0xff]
        %v209 = vld [vmem:[#allocation5 + $0x8] sm:$0xff]
        %v210 = vadd.f32 %v206, %v208
        %v211 = vadd.f32 %v207, %v209
        %212 = vst [vmem:[%s202] sm:$0xff] %v210
        %213 = vst [vmem:[%s202 + $0x8] sm:$0xff] %v211
        %s214 = sand.u32 %s96, 1
        %s215 = scalar_lea.sflag [#allocation4], %s214
        %s216 = sand.u32 %s96, 1
        %s217 = smul.addr %s216, 16
        %s218 = scalar_lea.vmem [#allocation7], %s217
        // Predicated region
        $region37: #{tpu_custom_call.1} parent=27 // pred_check
          %p219 = pneg %p106
        $region38: #{tpu_custom_call.1} parent=27 // pred_check_branch
          %221 = sbr.rel (%p219) target = $region40
        $region39: #{tpu_custom_call.1} parent=27 // pred_region
          %s222 = smul.u32 2, %s24
          %s224 = ssub.s32 256, 256
          %225 = vsyncadd %s215, %s224
          %s226 = smul.addr %s25, 2
          %s227 = sadd.s32 %s222, %s226
          %s228 = smul.addr %s227, 128
          %s229 = scalar_lea.hbm %s2, %s228
          %s230 = sshll.u32 %s218, 4
          %s231 = int_to_ptr.vmem [resolvable:$true] %s230
          %236 = dma.vmem_to_hbm [thread:$0]  %s231, 256, %s229, %s215, 128, 128, 8
        $region40: #{tpu_custom_call.1} parent=27 // pred_fallthru
          _
      $region28: #{tpu_custom_call.1} parent=5 // pred_fallthru
        _
      %p237 = scmp.le.s32.totalorder 2, %s15
      // Predicated region
      $region41: #{tpu_custom_call.1} parent=5 // pred_check
        %p238 = pneg %p237
      $region42: #{tpu_custom_call.1} parent=5 // pred_check_branch
        %240 = sbr.rel (%p238) target = $region44
      $region43: #{tpu_custom_call.1} parent=5 // pred_region
        %s241 = ssub.s32 %s15, 2
        // Predicated region
        $region45: #{tpu_custom_call.1} parent=43 // pred_check
          %p242 = pneg %p112
        $region46: #{tpu_custom_call.1} parent=43 // pred_check_branch
          %244 = sbr.rel (%p242) target = $region48
        $region47: #{tpu_custom_call.1} parent=43 // pred_region
          %s245 = sand.u32 %s97, 1
          %s246 = scalar_lea.sflag [#allocation4], %s245
          %s247 = sand.u32 %s97, 1
          %s248 = smul.addr %s247, 16
          %s249 = scalar_lea.vmem [#allocation7], %s248
          %250 = dma.done %s246, 256
        $region48: #{tpu_custom_call.1} parent=43 // pred_fallthru
          _
      $region44: #{tpu_custom_call.1} parent=5 // pred_fallthru
        _
    $region6: #{tpu_custom_call.1} parent=1 // loop_footer
      %s19 = sadd.s32 1, %s15
    $region7: #{tpu_custom_call.1} parent=1 // loop_footer_branch
      %14 = sbr.rel target = $region3
    $region8: #{tpu_custom_call.1} parent=1 // loop_exit
      _
    %251 = vsyncpa [#allocation3], 1
    %s252 = scalar_lea.sflag [#allocation3], 1
    %253 = vsyncpa %s252, 1
    %254 = vsyncpa [#allocation6], 1
    %255 = vsyncpa [#allocation4], 1
    %s256 = scalar_lea.sflag [#allocation4], 1
    %257 = vsyncpa %s256, 1

</llo_original>
